<compile_context>
chip_gen: v5e
topology: v5e:2x2
jax: 0.10.0
libtpu: 0.0.40
codegen_flags: <defaults>
</compile_context>

<pallas_src>
import functools

import jax
import jax.numpy as jnp
from jax.experimental import pallas as pl
from jax.experimental.pallas import tpu as pltpu

_BN_EPS = 1e-5


def _round_up(x, m):
    return (x + m - 1) // m * m


def _tpu_tuning():
    """Returns (tm_max, vmem_limit_bytes), chosen per TPU generation."""
    vmem_cap = 0
    try:
        info = pltpu.get_tpu_info()
        vmem_cap = int(getattr(info, "vmem_capacity_bytes", 0))
    except Exception:
        vmem_cap = 0
    if vmem_cap >= 128 * 1024 * 1024:          # v5e / v6e / v5p: 128 MiB VMEM
        return 1024, 96 * 1024 * 1024
    return 512, 48 * 1024 * 1024               # v7x (64 MiB VMEM) or unknown


# ---------------------------------------------------------------------------
# Pallas kernels
# ---------------------------------------------------------------------------
def _direct_conv3x3_kernel(x_ref, w_ref, y_ref, s1_ref, s2_ref,
                           *, h, w, cin, cout):
    """Fused 3x3 stride-1 conv (phase 1), one padded NHWC image per step.

    Accumulates the 9 shifted matmuls in f32 on-chip, writes the bf16 conv
    output and per-image BN partial sums (reduced outside the kernel).
    """
    acc = jnp.zeros((h * w, cout), jnp.float32)
    for i in range(3):
        for j in range(3):
            win = x_ref[0, i:i + h, j:j + w, :].reshape(h * w, cin)
            wt = w_ref[(3 * i + j) * cin:(3 * i + j + 1) * cin, :]
            acc = acc + jnp.dot(win, wt, preferred_element_type=jnp.float32)
    y_ref[0] = acc.astype(y_ref.dtype)
    s1_ref[0] = jnp.sum(acc, axis=0, keepdims=True)
    s2_ref[0] = jnp.sum(acc * acc, axis=0, keepdims=True)


def _mm_stats_kernel(x_ref, w_ref, y_ref, s1_ref, s2_ref):
    """Phase 1 (im2col path): MXU matmul tile + per-tile BN partial sums."""
    acc = jnp.dot(x_ref[...], w_ref[...], preferred_element_type=jnp.float32)
    y_ref[...] = acc.astype(y_ref.dtype)
    s1_ref[0] = jnp.sum(acc, axis=0, keepdims=True)
    s2_ref[0] = jnp.sum(acc * acc, axis=0, keepdims=True)


def _bn_apply_kernel(y_ref, sc_ref, sh_ref, o_ref, *, relu):
    """Phase 2: y * scale + shift [+ ReLU] -> bf16 output tile."""
    out = y_ref[...].astype(jnp.float32) * sc_ref[...] + sh_ref[...]
    if relu:
        out = jnp.maximum(out, 0.0)
    o_ref[...] = out.astype(o_ref.dtype)


def _bn_apply_res_kernel(y_ref, sc_ref, sh_ref, r_ref, o_ref):
    """Phase 2 with residual: y * scale + shift + residual -> ReLU -> bf16."""
    out = (y_ref[...].astype(jnp.float32) * sc_ref[...] + sh_ref[...]
           + r_ref[...].astype(jnp.float32))
    o_ref[...] = jnp.maximum(out, 0.0).astype(o_ref.dtype)


def _maxpool_dense_kernel(x_ref, o_ref, *, k, oh, ow):
    """Dense (stride-1) k x k sliding max in bf16; contiguous slices only."""
    out = None
    for i in range(k):
        for j in range(k):
            win = x_ref[0, i:i + oh, j:j + ow, :]
            out = win if out is None else jnp.maximum(out, win)
    o_ref[0] = out


def _head_kernel(x_ref, w_ref, b_ref, o_ref):
    """Adaptive avg-pool to (1,1) + FC, one image per grid step."""
    pooled = jnp.mean(x_ref[0].astype(jnp.float32), axis=0, keepdims=True)
    o_ref[0] = (jnp.dot(pooled.astype(jnp.bfloat16), w_ref[...],
                        preferred_element_type=jnp.float32) + b_ref[...])


# ---------------------------------------------------------------------------
# pallas_call wrappers
# ---------------------------------------------------------------------------
def _direct_conv3x3(xpad, wmat, h, w, cout, vmem_limit):
    n, hp, wp, cin = xpad.shape
    m_img = h * w
    return pl.pallas_call(
        functools.partial(_direct_conv3x3_kernel, h=h, w=w, cin=cin, cout=cout),
        out_shape=(
            jax.ShapeDtypeStruct((n, m_img, cout), jnp.bfloat16),
            jax.ShapeDtypeStruct((n, 1, cout), jnp.float32),
            jax.ShapeDtypeStruct((n, 1, cout), jnp.float32),
        ),
        grid=(n,),
        in_specs=[
            pl.BlockSpec((1, hp, wp, cin), lambda i: (i, 0, 0, 0)),
            pl.BlockSpec((9 * cin, cout), lambda i: (0, 0)),   # resident weight
        ],
        out_specs=(
            pl.BlockSpec((1, m_img, cout), lambda i: (i, 0, 0)),
            pl.BlockSpec((1, 1, cout), lambda i: (i, 0, 0)),
            pl.BlockSpec((1, 1, cout), lambda i: (i, 0, 0)),
        ),
        compiler_params=pltpu.CompilerParams(
            dimension_semantics=("parallel",),
            vmem_limit_bytes=vmem_limit),
    )(xpad, wmat)


def _conv_matmul_stats(cols, wmat, tm, vmem_limit):
    m_pad, kp = cols.shape
    cout = wmat.shape[1]
    grid_m = m_pad // tm
    return pl.pallas_call(
        _mm_stats_kernel,
        out_shape=(
            jax.ShapeDtypeStruct((m_pad, cout), jnp.bfloat16),
            jax.ShapeDtypeStruct((grid_m, 1, cout), jnp.float32),
            jax.ShapeDtypeStruct((grid_m, 1, cout), jnp.float32),
        ),
        grid=(grid_m,),
        in_specs=[
            pl.BlockSpec((tm, kp), lambda i: (i, 0)),
            pl.BlockSpec((kp, cout), lambda i: (0, 0)),        # resident weight
        ],
        out_specs=(
            pl.BlockSpec((tm, cout), lambda i: (i, 0)),
            pl.BlockSpec((1, 1, cout), lambda i: (i, 0, 0)),   # per-tile partials
            pl.BlockSpec((1, 1, cout), lambda i: (i, 0, 0)),
        ),
        compiler_params=pltpu.CompilerParams(
            dimension_semantics=("parallel",),                 # megacore-shardable
            vmem_limit_bytes=vmem_limit),
    )(cols, wmat)


def _bn_apply(y, scale, shift, residual, relu, cfg):
    """y (m, cout) bf16 -> normalized bf16. Lane-dense reshape for Cout=64."""
    tm_max, vmem_limit = cfg
    m, cout = y.shape
    fold = (cout == 64 and m % 2 == 0)
    if fold:
        y = y.reshape(m // 2, 128)
        scale = jnp.concatenate([scale, scale])
        shift = jnp.concatenate([shift, shift])
        if residual is not None:
            residual = residual.reshape(m // 2, 128)
    rows, cw = y.shape
    tm = min(tm_max, _round_up(rows, 16))
    rows_pad = _round_up(rows, tm)
    if rows_pad != rows:
        y = jnp.pad(y, ((0, rows_pad - rows), (0, 0)))
        if residual is not None:
            residual = jnp.pad(residual, ((0, rows_pad - rows), (0, 0)))
    scale2 = scale.reshape(1, cw).astype(jnp.float32)
    shift2 = shift.reshape(1, cw).astype(jnp.float32)

    args = [y, scale2, shift2]
    in_specs = [
        pl.BlockSpec((tm, cw), lambda i: (i, 0)),
        pl.BlockSpec((1, cw), lambda i: (0, 0)),
        pl.BlockSpec((1, cw), lambda i: (0, 0)),
    ]
    if residual is not None:
        kernel = _bn_apply_res_kernel
        args.append(residual)
        in_specs.append(pl.BlockSpec((tm, cw), lambda i: (i, 0)))
    else:
        kernel = functools.partial(_bn_apply_kernel, relu=relu)

    out = pl.pallas_call(
        kernel,
        out_shape=jax.ShapeDtypeStruct((rows_pad, cw), jnp.bfloat16),
        grid=(rows_pad // tm,),
        in_specs=in_specs,
        out_specs=pl.BlockSpec((tm, cw), lambda i: (i, 0)),
        compiler_params=pltpu.CompilerParams(
            dimension_semantics=("parallel",),
            vmem_limit_bytes=vmem_limit),
    )(*args)
    if rows_pad != rows:
        out = out[:rows]
    if fold:
        out = out.reshape(m, cout)
    return out


def _im2col(x, kh, kw, stride, padding):
    """Plain-JAX glue: NHWC bf16 -> (N*OH*OW, kh*kw*C). Only used for the
    7x7 stem, the stride-2 3x3 convs and the 1x1 downsamples."""
    n, h, w, c = x.shape
    oh = (h + 2 * padding - kh) // stride + 1
    ow = (w + 2 * padding - kw) // stride + 1
    xp = jnp.pad(x, ((0, 0), (padding, padding), (padding, padding), (0, 0)))
    cols = []
    for i in range(kh):
        for j in range(kw):
            cols.append(
                xp[:, i:i + stride * (oh - 1) + 1:stride,
                      j:j + stride * (ow - 1) + 1:stride, :])
    cols = jnp.concatenate(cols, axis=-1).reshape(n * oh * ow, kh * kw * c)
    return cols, oh, ow


def conv_bn_act(x, conv, gamma, beta, cfg, residual=None, relu=True):
    """conv2d(bias=False) + BatchNorm2d(batch stats) [+ residual] [+ ReLU].

    NHWC bf16 in / NHWC bf16 out. Phase 1 (conv + partial stats) and phase 2
    (normalize) are separate Pallas sweeps so the BN statistics stay global
    over all N*OH*OW positions while the conv is tiled.
    """
    tm_max, vmem_limit = cfg
    n = x.shape[0]
    cout = conv["cout"]

    if conv["direct"]:                                   # fused 3x3 stride-1 path
        h, w = x.shape[1], x.shape[2]
        xpad = jnp.pad(x, ((0, 0), (1, 1), (1, 1), (0, 0)))
        y3, s1, s2 = _direct_conv3x3(xpad, conv["w"], h, w, cout, vmem_limit)
        oh, ow = h, w
        m = n * oh * ow
        y2d = y3.reshape(m, cout)
    else:                                                # im2col + tiled matmul
        cols, oh, ow = _im2col(x, conv["kh"], conv["kw"], conv["stride"],
                               conv["padding"])
        m, k = cols.shape
        kp = conv["w"].shape[0]
        tm = min(tm_max, _round_up(m, 16))
        m_pad = _round_up(m, tm)
        if m_pad != m or kp != k:
            # Zero rows/cols contribute nothing to the matmul or the stats.
            cols = jnp.pad(cols, ((0, m_pad - m), (0, kp - k)))
        y2d, s1, s2 = _conv_matmul_stats(cols, conv["w"], tm, vmem_limit)
        if m_pad != m:
            y2d = y2d[:m]

    # Global batch statistics (biased variance, matching PyTorch training
    # forward) from the per-tile f32 partials.
    s1 = jnp.sum(s1, axis=(0, 1))
    s2 = jnp.sum(s2, axis=(0, 1))
    mean = s1 / m
    var = jnp.maximum(s2 / m - mean * mean, 0.0)
    scale = gamma * jax.lax.rsqrt(var + _BN_EPS)
    shift = beta - mean * scale

    res2d = None if residual is None else residual.reshape(m, cout)
    out2d = _bn_apply(y2d, scale, shift, res2d, relu, cfg)
    return out2d.reshape(n, oh, ow, cout)


def maxpool(x, cfg, k=3, s=2, p=1):
    """MaxPool2d(3, 2, 1) in bf16. The kernel computes the dense (stride-1)
    sliding max with contiguous slices; the stride-2 downselect is plain JAX.
    Zero padding == -inf padding here because the input is post-ReLU."""
    _, vmem_limit = cfg
    n, h, w, c = x.shape
    oh = (h + 2 * p - k) // s + 1
    ow = (w + 2 * p - k) // s + 1
    xp = jnp.pad(x, ((0, 0), (p, p), (p, p), (0, 0)))
    hp, wp = h + 2 * p, w + 2 * p
    dh, dw = hp - k + 1, wp - k + 1
    dense = pl.pallas_call(
        functools.partial(_maxpool_dense_kernel, k=k, oh=dh, ow=dw),
        out_shape=jax.ShapeDtypeStruct((n, dh, dw, c), x.dtype),
        grid=(n,),
        in_specs=[pl.BlockSpec((1, hp, wp, c), lambda i: (i, 0, 0, 0))],
        out_specs=pl.BlockSpec((1, dh, dw, c), lambda i: (i, 0, 0, 0)),
        compiler_params=pltpu.CompilerParams(
            dimension_semantics=("parallel",),
            vmem_limit_bytes=vmem_limit),
    )(xp)
    return dense[:, :s * (oh - 1) + 1:s, :s * (ow - 1) + 1:s, :]


def head(x, fc_w, fc_b, cfg):
    """Adaptive avg-pool (1,1) + Linear, tiled over the batch."""
    _, vmem_limit = cfg
    n, h, w, c = x.shape
    nc = fc_w.shape[1]
    out = pl.pallas_call(
        _head_kernel,
        out_shape=jax.ShapeDtypeStruct((n, 1, nc), jnp.float32),
        grid=(n,),
        in_specs=[
            pl.BlockSpec((1, h * w, c), lambda i: (i, 0, 0)),
            pl.BlockSpec((c, nc), lambda i: (0, 0)),
            pl.BlockSpec((1, nc), lambda i: (0, 0)),
        ],
        out_specs=pl.BlockSpec((1, 1, nc), lambda i: (i, 0, 0)),
        compiler_params=pltpu.CompilerParams(
            dimension_semantics=("parallel",),
            vmem_limit_bytes=vmem_limit),
    )(x.reshape(n, h * w, c), fc_w, fc_b)
    return out.reshape(n, nc)


# ---------------------------------------------------------------------------
# Model: parameters + forward
# ---------------------------------------------------------------------------
def init_params(key, num_classes=10):
    keys = iter(jax.random.split(key, 64))

    def prep_conv(cout, cin, kh, kw, stride, padding):
        fan_in = cin * kh * kw
        w = (jax.random.normal(next(keys), (cout, cin, kh, kw), jnp.float32)
             * jnp.sqrt(2.0 / fan_in))
        k = kh * kw * cin
        # PyTorch (Cout, Cin, kh, kw) -> (kh*kw*Cin, Cout), tap-major; matches
        # both the in-kernel direct-conv tap slicing and the im2col column
        # order. Pre-cast to bf16 once (no per-forward transposes).
        wmat = jnp.transpose(w, (2, 3, 1, 0)).reshape(k, cout)
        direct = (kh == 3 and kw == 3 and stride == 1)
        if not direct:
            kp = _round_up(k, 128)
            wmat = jnp.pad(wmat, ((0, kp - k), (0, 0)))
        return {"w": wmat.astype(jnp.bfloat16), "kh": kh, "kw": kw,
                "stride": stride, "padding": padding, "cout": cout,
                "cin": cin, "direct": direct}

    def bn(c):
        return jnp.ones((c,), jnp.float32), jnp.zeros((c,), jnp.float32)

    params = {}
    params["stem"] = prep_conv(64, 3, 7, 7, stride=2, padding=3)
    params["stem_g"], params["stem_b"] = bn(64)

    layers = []
    in_ch = 64
    for out_ch, nblocks, stride in [(64, 3, 1), (128, 4, 2),
                                    (256, 6, 2), (512, 3, 2)]:
        blocks = []
        for b in range(nblocks):
            s = stride if b == 0 else 1
            bp = {"conv1": prep_conv(out_ch, in_ch, 3, 3, stride=s, padding=1),
                  "conv2": prep_conv(out_ch, out_ch, 3, 3, stride=1, padding=1)}
            bp["bn1_g"], bp["bn1_b"] = bn(out_ch)
            bp["bn2_g"], bp["bn2_b"] = bn(out_ch)
            if s != 1 or in_ch != out_ch:
                bp["down"] = prep_conv(out_ch, in_ch, 1, 1, stride=s, padding=0)
                bp["down_g"], bp["down_b"] = bn(out_ch)
            blocks.append(bp)
            in_ch = out_ch
        layers.append(blocks)
    params["layers"] = layers

    params["fc_w"] = (jax.random.normal(next(keys), (512, num_classes),
                                        jnp.float32)
                      / jnp.sqrt(512.0)).astype(jnp.bfloat16)
    params["fc_b"] = jnp.zeros((1, num_classes), jnp.float32)
    return params


def residual_block(x, bp, cfg):
    if "down" in bp:
        residual = conv_bn_act(x, bp["down"], bp["down_g"], bp["down_b"], cfg,
                               relu=False)
    else:
        residual = x
    out = conv_bn_act(x, bp["conv1"], bp["bn1_g"], bp["bn1_b"], cfg, relu=True)
    out = conv_bn_act(out, bp["conv2"], bp["bn2_g"], bp["bn2_b"], cfg,
                      residual=residual, relu=True)
    return out


def resnet_forward(params, x_nchw):
    # NOTE: run eagerly (params carry static python metadata); for production
    # jit with the params closed over / metadata split out as static.
    cfg = _tpu_tuning()
    # Layout: NCHW input (PyTorch convention) -> NHWC bf16 for all kernels.
    x = jnp.transpose(x_nchw, (0, 2, 3, 1)).astype(jnp.bfloat16)
    x = conv_bn_act(x, params["stem"], params["stem_g"], params["stem_b"], cfg,
                    relu=True)
    x = maxpool(x, cfg, k=3, s=2, p=1)
    for blocks in params["layers"]:
        for bp in blocks:
            x = residual_block(x, bp, cfg)
    return head(x, params["fc_w"], params["fc_b"], cfg)


# ---------------------------------------------------------------------------
if __name__ == "__main__":
    key = jax.random.PRNGKey(0)
    pkey, xkey = jax.random.split(key)
    num_classes = 10
    params = init_params(pkey, num_classes=num_classes)

    # Small deterministic input consistent with the module (3 input channels).
    x = jax.random.normal(xkey, (2, 3, 16, 16), jnp.float32)

    out = resnet_forward(params, x)
    out = jax.block_until_ready(out)
    assert out.shape == (2, num_classes), out.shape
    assert bool(jnp.all(jnp.isfinite(out)))
    print("KERNEL_OK")
</pallas_src>

<mosaic_0001>
module attributes {stable_mosaic.version = 11 : i64} {
  func.func @_mm_stats_kernel(%arg0: i32, %arg1: memref<128x256xbf16, #tpu.memory_space<vmem>>, %arg2: memref<256x64xbf16, #tpu.memory_space<vmem>>, %arg3: memref<128x64xbf16, #tpu.memory_space<vmem>>, %arg4: memref<1x1x64xf32, #tpu.memory_space<vmem>>, %arg5: memref<1x1x64xf32, #tpu.memory_space<vmem>>) attributes {dimension_semantics = [#tpu.dimension_semantics<parallel>], iteration_bounds = array<i64: 1>, scalar_prefetch = 0 : i64, scratch_operands = 0 : i64, tpu.core_type = #tpu.core_type<tc>, window_params = [{transform_indices = @transform_0, window_bounds = array<i64: 128, 256>}, {pipeline_mode = #tpu.pipeline_mode<synchronous>, transform_indices = @transform_1, window_bounds = array<i64: 256, 64>}, {transform_indices = @transform_2, window_bounds = array<i64: 128, 64>}, {transform_indices = @transform_3, window_bounds = array<i64: 1, 1, 64>}, {transform_indices = @transform_4, window_bounds = array<i64: 1, 1, 64>}]} {
    %c0 = arith.constant 0 : index
    %c0_0 = arith.constant 0 : index
    %0 = vector.load %arg1[%c0, %c0_0] : memref<128x256xbf16, #tpu.memory_space<vmem>>, vector<128x256xbf16>
    %c0_1 = arith.constant 0 : index
    %c0_2 = arith.constant 0 : index
    %1 = vector.load %arg2[%c0_1, %c0_2] : memref<256x64xbf16, #tpu.memory_space<vmem>>, vector<256x64xbf16>
    %cst = arith.constant dense<0.000000e+00> : vector<128x64xf32>
    %2 = tpu.matmul %0, %1, %cst {dimension_numbers = #tpu.dot_dimension_numbers<[1], [0], [0], [1], [0, 0, 1, 1], [], []>} : vector<128x256xbf16>, vector<256x64xbf16>, vector<128x64xf32> -> vector<128x64xf32>
    %3 = arith.truncf %2 : vector<128x64xf32> to vector<128x64xbf16>
    %c0_3 = arith.constant 0 : index
    %c0_4 = arith.constant 0 : index
    %4 = vector.load %arg3[%c0_3, %c0_4] : memref<128x64xbf16, #tpu.memory_space<vmem>>, vector<128x64xbf16>
    tpu.vector_store %arg3[%c0_3, %c0_4], %3 {strides = array<i32>} : memref<128x64xbf16, #tpu.memory_space<vmem>>, vector<128x64xbf16>,
    %cst_5 = arith.constant dense<0.000000e+00> : vector<64xf32>
    %5 = vector.multi_reduction <add>, %2, %cst_5 [0] : vector<128x64xf32> to vector<64xf32>
    %6 = vector.shape_cast %5 : vector<64xf32> to vector<1x64xf32>
    %c0_6 = arith.constant 0 : index
    %c0_7 = arith.constant 0 : index
    %c0_8 = arith.constant 0 : index
    %7 = vector.load %arg4[%c0_6, %c0_7, %c0_8] : memref<1x1x64xf32, #tpu.memory_space<vmem>>, vector<1x1x64xf32>
    %8 = vector.shape_cast %7 : vector<1x1x64xf32> to vector<1x64xf32>
    %9 = vector.shape_cast %6 : vector<1x64xf32> to vector<1x1x64xf32>
    tpu.vector_store %arg4[%c0_6, %c0_7, %c0_8], %9 {strides = array<i32>} : memref<1x1x64xf32, #tpu.memory_space<vmem>>, vector<1x1x64xf32>,
    %10 = arith.mulf %2, %2 : vector<128x64xf32>
    %cst_9 = arith.constant dense<0.000000e+00> : vector<64xf32>
    %11 = vector.multi_reduction <add>, %10, %cst_9 [0] : vector<128x64xf32> to vector<64xf32>
    %12 = vector.shape_cast %11 : vector<64xf32> to vector<1x64xf32>
    %c0_10 = arith.constant 0 : index
    %c0_11 = arith.constant 0 : index
    %c0_12 = arith.constant 0 : index
    %13 = vector.load %arg5[%c0_10, %c0_11, %c0_12] : memref<1x1x64xf32, #tpu.memory_space<vmem>>, vector<1x1x64xf32>
    %14 = vector.shape_cast %13 : vector<1x1x64xf32> to vector<1x64xf32>
    %15 = vector.shape_cast %12 : vector<1x64xf32> to vector<1x1x64xf32>
    tpu.vector_store %arg5[%c0_10, %c0_11, %c0_12], %15 {strides = array<i32>} : memref<1x1x64xf32, #tpu.memory_space<vmem>>, vector<1x1x64xf32>,
    return
  }
  func.func @transform_0(%arg0: i32) -> (i32, i32) {
    %c0_i32 = arith.constant 0 : i32
    %c0_i32_0 = arith.constant 0 : i32
    return %arg0, %c0_i32 : i32, i32
  }
  func.func @transform_1(%arg0: i32) -> (i32, i32) {
    %c0_i32 = arith.constant 0 : i32
    %c0_i32_0 = arith.constant 0 : i32
    %c0_i32_1 = arith.constant 0 : i32
    return %c0_i32, %c0_i32_0 : i32, i32
  }
  func.func @transform_2(%arg0: i32) -> (i32, i32) {
    %c0_i32 = arith.constant 0 : i32
    %c0_i32_0 = arith.constant 0 : i32
    return %arg0, %c0_i32 : i32, i32
  }
  func.func @transform_3(%arg0: i32) -> (i32, i32, i32) {
    %c0_i32 = arith.constant 0 : i32
    %c0_i32_0 = arith.constant 0 : i32
    %c0_i32_1 = arith.constant 0 : i32
    return %arg0, %c0_i32, %c0_i32_0 : i32, i32, i32
  }
  func.func @transform_4(%arg0: i32) -> (i32, i32, i32) {
    %c0_i32 = arith.constant 0 : i32
    %c0_i32_0 = arith.constant 0 : i32
    %c0_i32_1 = arith.constant 0 : i32
    return %arg0, %c0_i32, %c0_i32_0 : i32, i32, i32
  }
}

</mosaic_0001>

<llo_original>
// kernel: tpu_custom_call.1
$region0: #{tpu_custom_call.1}
  #allocation0 [shape = 'u32[]', space=smem, size = 0x4, offset = 0x4, fixed_abs, tag = 'smem constant byte address 0x4 - core index']
  #allocation1 [shape = 'u32[72,128]{1,0:T(1,128)}', space=vmem, size = 0x9000, scoped, tag = 'internal scratch']
  %s0 = inlined_call_operand.vmem [shape: bf16[128,256], index: 0, kind: input, shape index: {}]
  %s1 = inlined_call_operand.vmem [shape: bf16[256,64], index: 1, kind: input, shape index: {}]
  %s2 = inlined_call_operand.vmem [shape: bf16[128,64], index: 2, kind: output, shape index: {0}]
  %s3 = inlined_call_operand.hbm [shape: f32[1,1,64], index: 3, kind: output, shape index: {1}]
  %s4 = inlined_call_operand.hbm [shape: f32[1,1,64], index: 4, kind: output, shape index: {2}]
  %5 = xla_tuple %s2, %s3, %s4
  %s6 = sld [smem:[#allocation0]]
  $region34: #{tpu_custom_call.1} parent=0
    _
  %s8 = ssub.s32 1, %s6
  %s9 = scalar_select 0, %s8, %s6
  $region1: #{tpu_custom_call.1} parent=0
    #allocation2 [shape = 'u8[512]{0}', space=vmem, size = 0x400, scoped, tag = 'output window, operand 1, single buffered']
    #allocation3 [shape = 's32[1]{0}', space=sflag, size = 0x4, scoped, tag = 'scoped memory for tpu_custom_call.1']
    #allocation4 [shape = 'u8[512]{0}', space=vmem, size = 0x400, scoped, tag = 'output window, operand 2, single buffered']
    #allocation5 [shape = 's32[1]{0}', space=sflag, size = 0x4, scoped, tag = 'scoped memory for tpu_custom_call.1']
    %10 = vsyncpa [#allocation3], 0
    %11 = vsyncpa [#allocation5], 0
    // Predicated region
    $region2: #{tpu_custom_call.1} parent=1 // pred_check
      _
    $region3: #{tpu_custom_call.1} parent=1 // pred_check_branch
      %13 = sbr.rel (0) target = $region5
    $region4: #{tpu_custom_call.1} parent=1 // pred_region
      _
    $region5: #{tpu_custom_call.1} parent=1 // pred_fallthru
      _
    // Predicated region
    $region6: #{tpu_custom_call.1} parent=1 // pred_check
      _
    $region7: #{tpu_custom_call.1} parent=1 // pred_check_branch
      %15 = sbr.rel (0) target = $region9
    $region8: #{tpu_custom_call.1} parent=1 // pred_region
      _
    $region9: #{tpu_custom_call.1} parent=1 // pred_fallthru
      _
    %v16 = vld [vmem:[%s0] sm:$0xff]
    %v17 = vld [vmem:[%s0 + $0x8] sm:$0xff]
    %v18 = vld [vmem:[%s0 + $0x10] sm:$0xff]
    %v19 = vld [vmem:[%s0 + $0x18] sm:$0xff]
    %v20 = vld [vmem:[%s0 + $0x20] sm:$0xff]
    %v21 = vld [vmem:[%s0 + $0x28] sm:$0xff]
    %v22 = vld [vmem:[%s0 + $0x30] sm:$0xff]
    %v23 = vld [vmem:[%s0 + $0x38] sm:$0xff]
    %v24 = vld [vmem:[%s0 + $0x40] sm:$0xff]
    %v25 = vld [vmem:[%s0 + $0x48] sm:$0xff]
    %v26 = vld [vmem:[%s0 + $0x50] sm:$0xff]
    %v27 = vld [vmem:[%s0 + $0x58] sm:$0xff]
    %v28 = vld [vmem:[%s0 + $0x60] sm:$0xff]
    %v29 = vld [vmem:[%s0 + $0x68] sm:$0xff]
    %v30 = vld [vmem:[%s0 + $0x70] sm:$0xff]
    %v31 = vld [vmem:[%s0 + $0x78] sm:$0xff]
    %v32 = vld [vmem:[%s1] sm:$0xf]
    %v33 = vld [vmem:[%s1 + $0x4] sm:$0xf]
    %v34 = vld [vmem:[%s1 + $0x8] sm:$0xf]
    %v35 = vld [vmem:[%s1 + $0xc] sm:$0xf]
    %v36 = vld [vmem:[%s1 + $0x10] sm:$0xf]
    %v37 = vld [vmem:[%s1 + $0x14] sm:$0xf]
    %v38 = vld [vmem:[%s1 + $0x18] sm:$0xf]
    %v39 = vld [vmem:[%s1 + $0x1c] sm:$0xf]
    %v40 = vld [vmem:[%s1 + $0x20] sm:$0xf]
    %v41 = vld [vmem:[%s1 + $0x24] sm:$0xf]
    %v42 = vld [vmem:[%s1 + $0x28] sm:$0xf]
    %v43 = vld [vmem:[%s1 + $0x2c] sm:$0xf]
    %v44 = vld [vmem:[%s1 + $0x30] sm:$0xf]
    %v45 = vld [vmem:[%s1 + $0x34] sm:$0xf]
    %v46 = vld [vmem:[%s1 + $0x38] sm:$0xf]
    %v47 = vld [vmem:[%s1 + $0x3c] sm:$0xf]
    %v48 = vld [vmem:[%s1 + $0x40] sm:$0xf]
    %v49 = vld [vmem:[%s1 + $0x44] sm:$0xf]
    %v50 = vld [vmem:[%s1 + $0x48] sm:$0xf]
    %v51 = vld [vmem:[%s1 + $0x4c] sm:$0xf]
    %v52 = vld [vmem:[%s1 + $0x50] sm:$0xf]
    %v53 = vld [vmem:[%s1 + $0x54] sm:$0xf]
    %v54 = vld [vmem:[%s1 + $0x58] sm:$0xf]
    %v55 = vld [vmem:[%s1 + $0x5c] sm:$0xf]
    %v56 = vld [vmem:[%s1 + $0x60] sm:$0xf]
    %v57 = vld [vmem:[%s1 + $0x64] sm:$0xf]
    %v58 = vld [vmem:[%s1 + $0x68] sm:$0xf]
    %v59 = vld [vmem:[%s1 + $0x6c] sm:$0xf]
    %v60 = vld [vmem:[%s1 + $0x70] sm:$0xf]
    %v61 = vld [vmem:[%s1 + $0x74] sm:$0xf]
    %v62 = vld [vmem:[%s1 + $0x78] sm:$0xf]
    %v63 = vld [vmem:[%s1 + $0x7c] sm:$0xf]
    %v80 = vunpack.c.l.b16 %v16
    %v81 = vunpack.c.h.b16 %v16
    %v82 = vunpack.c.l.b16 %v17
    %v83 = vunpack.c.h.b16 %v17
    %v84 = vunpack.c.l.b16 %v18
    %v85 = vunpack.c.h.b16 %v18
    %v86 = vunpack.c.l.b16 %v19
    %v87 = vunpack.c.h.b16 %v19
    %v88 = vunpack.c.l.b16 %v20
    %v89 = vunpack.c.h.b16 %v20
    %v90 = vunpack.c.l.b16 %v21
    %v91 = vunpack.c.h.b16 %v21
    %v92 = vunpack.c.l.b16 %v22
    %v93 = vunpack.c.h.b16 %v22
    %v94 = vunpack.c.l.b16 %v23
    %v95 = vunpack.c.h.b16 %v23
    %v96 = vunpack.c.l.b16 %v24
    %v97 = vunpack.c.h.b16 %v24
    %v98 = vunpack.c.l.b16 %v25
    %v99 = vunpack.c.h.b16 %v25
    %v100 = vunpack.c.l.b16 %v26
    %v101 = vunpack.c.h.b16 %v26
    %v102 = vunpack.c.l.b16 %v27
    %v103 = vunpack.c.h.b16 %v27
    %v104 = vunpack.c.l.b16 %v28
    %v105 = vunpack.c.h.b16 %v28
    %v106 = vunpack.c.l.b16 %v29
    %v107 = vunpack.c.h.b16 %v29
    %v108 = vunpack.c.l.b16 %v30
    %v109 = vunpack.c.h.b16 %v30
    %v110 = vunpack.c.l.b16 %v31
    %v111 = vunpack.c.h.b16 %v31
    %v112 = vpack.c.b16 %v82, %v80
    %v113 = vpack.c.b16 %v83, %v81
    %v114 = vpack.c.b16 %v86, %v84
    %v115 = vpack.c.b16 %v87, %v85
    %v116 = vpack.c.b16 %v90, %v88
    %v117 = vpack.c.b16 %v91, %v89
    %v118 = vpack.c.b16 %v94, %v92
    %v119 = vpack.c.b16 %v95, %v93
    %v120 = vpack.c.b16 %v98, %v96
    %v121 = vpack.c.b16 %v99, %v97
    %v122 = vpack.c.b16 %v102, %v100
    %v123 = vpack.c.b16 %v103, %v101
    %v124 = vpack.c.b16 %v106, %v104
    %v125 = vpack.c.b16 %v107, %v105
    %v126 = vpack.c.b16 %v110, %v108
    %v127 = vpack.c.b16 %v111, %v109
    %v176 = vunpack.c.l.b16 %v32
    %v177 = vunpack.c.l.b16 %v33
    %v178 = vunpack.c.l.b16 %v34
    %v179 = vunpack.c.l.b16 %v35
    %v180 = vunpack.c.l.b16 %v36
    %v181 = vunpack.c.l.b16 %v37
    %v182 = vunpack.c.l.b16 %v38
    %v183 = vunpack.c.l.b16 %v39
    %v184 = vunpack.c.l.b16 %v40
    %v185 = vunpack.c.l.b16 %v41
    %v186 = vunpack.c.l.b16 %v42
    %v187 = vunpack.c.l.b16 %v43
    %v188 = vunpack.c.l.b16 %v44
    %v189 = vunpack.c.l.b16 %v45
    %v190 = vunpack.c.l.b16 %v46
    %v191 = vunpack.c.l.b16 %v47
    %v192 = vunpack.c.l.b16 %v48
    %v193 = vunpack.c.l.b16 %v49
    %v194 = vunpack.c.l.b16 %v50
    %v195 = vunpack.c.l.b16 %v51
    %v196 = vunpack.c.l.b16 %v52
    %v197 = vunpack.c.l.b16 %v53
    %v198 = vunpack.c.l.b16 %v54
    %v199 = vunpack.c.l.b16 %v55
    %v200 = vunpack.c.l.b16 %v56
    %v201 = vunpack.c.l.b16 %v57
    %v202 = vunpack.c.l.b16 %v58
    %v203 = vunpack.c.l.b16 %v59
    %v204 = vunpack.c.l.b16 %v60
    %v205 = vunpack.c.l.b16 %v61
    %v206 = vunpack.c.l.b16 %v62
    %v207 = vunpack.c.l.b16 %v63
    %v208 = vpack.c.b16 %v177, %v176
    %v209 = vpack.c.b16 %v179, %v178
    %v210 = vpack.c.b16 %v181, %v180
    %v211 = vpack.c.b16 %v183, %v182
    %v212 = vpack.c.b16 %v185, %v184
    %v213 = vpack.c.b16 %v187, %v186
    %v214 = vpack.c.b16 %v189, %v188
    %v215 = vpack.c.b16 %v191, %v190
    %v216 = vpack.c.b16 %v193, %v192
    %v217 = vpack.c.b16 %v195, %v194
    %v218 = vpack.c.b16 %v197, %v196
    %v219 = vpack.c.b16 %v199, %v198
    %v220 = vpack.c.b16 %v201, %v200
    %v221 = vpack.c.b16 %v203, %v202
    %v222 = vpack.c.b16 %v205, %v204
    %v223 = vpack.c.b16 %v207, %v206
    %240 = vmatpush.bf16.msra.mxu0 %v215
    %241 = vmatpush.bf16.msra.mxu0 %v214
    %242 = vmatpush.bf16.msra.mxu0 %v213
    %243 = vmatpush.bf16.msra.mxu0 %v212
    %244 = vmatpush.bf16.msra.mxu0 %v211
    %245 = vmatpush.bf16.msra.mxu0 %v210
    %246 = vmatpush.bf16.msra.mxu0 %v209
    %247 = vmatpush.bf16.msra.mxu0 %v208
    %248 = vmatmul.bf16.gmra.mxu0 %v112
    %v249 = vpop.f32.mrf.mxu0
    %v250 = vadd.f32 0.0, %v249
    %v251 = vpop.f32.mrf.mxu0
    %v252 = vadd.f32 0.0, %v251
    %253 = vmatmul.bf16.gmra.mxu0 %v114
    %v254 = vpop.f32.mrf.mxu0
    %v255 = vadd.f32 0.0, %v254
    %v256 = vpop.f32.mrf.mxu0
    %v257 = vadd.f32 0.0, %v256
    %258 = vmatmul.bf16.gmra.mxu0 %v116
    %v259 = vpop.f32.mrf.mxu0
    %v260 = vadd.f32 0.0, %v259
    %v261 = vpop.f32.mrf.mxu0
    %v262 = vadd.f32 0.0, %v261
    %263 = vmatmul.bf16.gmra.mxu0 %v118
    %v264 = vpop.f32.mrf.mxu0
    %v265 = vadd.f32 0.0, %v264
    %v266 = vpop.f32.mrf.mxu0
    %v267 = vadd.f32 0.0, %v266
    %268 = vmatmul.bf16.gmra.mxu0 %v120
    %v269 = vpop.f32.mrf.mxu0
    %v270 = vadd.f32 0.0, %v269
    %v271 = vpop.f32.mrf.mxu0
    %v272 = vadd.f32 0.0, %v271
    %273 = vmatmul.bf16.gmra.mxu0 %v122
    %v274 = vpop.f32.mrf.mxu0
    %v275 = vadd.f32 0.0, %v274
    %v276 = vpop.f32.mrf.mxu0
    %v277 = vadd.f32 0.0, %v276
    %278 = vmatmul.bf16.gmra.mxu0 %v124
    %v279 = vpop.f32.mrf.mxu0
    %v280 = vadd.f32 0.0, %v279
    %v281 = vpop.f32.mrf.mxu0
    %v282 = vadd.f32 0.0, %v281
    %283 = vmatmul.bf16.gmra.mxu0 %v126
    %v284 = vpop.f32.mrf.mxu0
    %v285 = vadd.f32 0.0, %v284
    %v286 = vpop.f32.mrf.mxu0
    %v287 = vadd.f32 0.0, %v286
    %288 = vdwg.mxu0
    %289 = vmatpush.bf16.msra.mxu0 %v223
    %290 = vmatpush.bf16.msra.mxu0 %v222
    %291 = vmatpush.bf16.msra.mxu0 %v221
    %292 = vmatpush.bf16.msra.mxu0 %v220
    %293 = vmatpush.bf16.msra.mxu0 %v219
    %294 = vmatpush.bf16.msra.mxu0 %v218
    %295 = vmatpush.bf16.msra.mxu0 %v217
    %296 = vmatpush.bf16.msra.mxu0 %v216
    %297 = vmatmul.bf16.gmra.mxu0 %v113
    %v298 = vpop.f32.mrf.mxu0
    %v299 = vadd.f32 %v250, %v298
    %v300 = vpop.f32.mrf.mxu0
    %v301 = vadd.f32 %v252, %v300
    %302 = vmatmul.bf16.gmra.mxu0 %v115
    %v303 = vpop.f32.mrf.mxu0
    %v304 = vadd.f32 %v255, %v303
    %v305 = vpop.f32.mrf.mxu0
    %v306 = vadd.f32 %v257, %v305
    %307 = vmatmul.bf16.gmra.mxu0 %v117
    %v308 = vpop.f32.mrf.mxu0
    %v309 = vadd.f32 %v260, %v308
    %v310 = vpop.f32.mrf.mxu0
    %v311 = vadd.f32 %v262, %v310
    %312 = vmatmul.bf16.gmra.mxu0 %v119
    %v313 = vpop.f32.mrf.mxu0
    %v314 = vadd.f32 %v265, %v313
    %v315 = vpop.f32.mrf.mxu0
    %v316 = vadd.f32 %v267, %v315
    %317 = vmatmul.bf16.gmra.mxu0 %v121
    %v318 = vpop.f32.mrf.mxu0
    %v319 = vadd.f32 %v270, %v318
    %v320 = vpop.f32.mrf.mxu0
    %v321 = vadd.f32 %v272, %v320
    %322 = vmatmul.bf16.gmra.mxu0 %v123
    %v323 = vpop.f32.mrf.mxu0
    %v324 = vadd.f32 %v275, %v323
    %v325 = vpop.f32.mrf.mxu0
    %v326 = vadd.f32 %v277, %v325
    %327 = vmatmul.bf16.gmra.mxu0 %v125
    %v328 = vpop.f32.mrf.mxu0
    %v329 = vadd.f32 %v280, %v328
    %v330 = vpop.f32.mrf.mxu0
    %v331 = vadd.f32 %v282, %v330
    %332 = vmatmul.bf16.gmra.mxu0 %v127
    %v333 = vpop.f32.mrf.mxu0
    %v334 = vadd.f32 %v285, %v333
    %v335 = vpop.f32.mrf.mxu0
    %v336 = vadd.f32 %v287, %v335
    %337 = vdwg.mxu0
    %v338 = vpack.c.bf16 %v299, %v299
    %v339 = vpack.c.bf16 %v301, %v301
    %v340 = vpack.c.bf16 %v304, %v304
    %v341 = vpack.c.bf16 %v306, %v306
    %v342 = vpack.c.bf16 %v309, %v309
    %v343 = vpack.c.bf16 %v311, %v311
    %v344 = vpack.c.bf16 %v314, %v314
    %v345 = vpack.c.bf16 %v316, %v316
    %v346 = vpack.c.bf16 %v319, %v319
    %v347 = vpack.c.bf16 %v321, %v321
    %v348 = vpack.c.bf16 %v324, %v324
    %v349 = vpack.c.bf16 %v326, %v326
    %v350 = vpack.c.bf16 %v329, %v329
    %v351 = vpack.c.bf16 %v331, %v331
    %v352 = vpack.c.bf16 %v334, %v334
    %v353 = vpack.c.bf16 %v336, %v336
    %vm354 = vcmask 519168
    %355 = vst.msk [vmem:[%s2] sm:$0xf] %vm354, %v338
    %356 = vst.msk [vmem:[%s2 + $0x4] sm:$0xf] %vm354, %v339
    %357 = vst.msk [vmem:[%s2 + $0x8] sm:$0xf] %vm354, %v340
    %358 = vst.msk [vmem:[%s2 + $0xc] sm:$0xf] %vm354, %v341
    %359 = vst.msk [vmem:[%s2 + $0x10] sm:$0xf] %vm354, %v342
    %360 = vst.msk [vmem:[%s2 + $0x14] sm:$0xf] %vm354, %v343
    %361 = vst.msk [vmem:[%s2 + $0x18] sm:$0xf] %vm354, %v344
    %362 = vst.msk [vmem:[%s2 + $0x1c] sm:$0xf] %vm354, %v345
    %363 = vst.msk [vmem:[%s2 + $0x20] sm:$0xf] %vm354, %v346
    %364 = vst.msk [vmem:[%s2 + $0x24] sm:$0xf] %vm354, %v347
    %365 = vst.msk [vmem:[%s2 + $0x28] sm:$0xf] %vm354, %v348
    %366 = vst.msk [vmem:[%s2 + $0x2c] sm:$0xf] %vm354, %v349
    %367 = vst.msk [vmem:[%s2 + $0x30] sm:$0xf] %vm354, %v350
    %368 = vst.msk [vmem:[%s2 + $0x34] sm:$0xf] %vm354, %v351
    %369 = vst.msk [vmem:[%s2 + $0x38] sm:$0xf] %vm354, %v352
    %370 = vst.msk [vmem:[%s2 + $0x3c] sm:$0xf] %vm354, %v353
    %vm371 = vcmask 523264
    %v372 = vsel %vm371, %v299, 0.0
    %v373 = vsel %vm371, %v301, 0.0
    %v374 = vadd.f32 %v372, %v373
    %v375 = vsel %vm371, %v304, 0.0
    %v376 = vadd.f32 %v374, %v375
    %v377 = vsel %vm371, %v306, 0.0
    %v378 = vadd.f32 %v376, %v377
    %v379 = vsel %vm371, %v309, 0.0
    %v380 = vadd.f32 %v378, %v379
    %v381 = vsel %vm371, %v311, 0.0
    %v382 = vadd.f32 %v380, %v381
    %v383 = vsel %vm371, %v314, 0.0
    %v384 = vadd.f32 %v382, %v383
    %v385 = vsel %vm371, %v316, 0.0
    %v386 = vadd.f32 %v384, %v385
    %v387 = vsel %vm371, %v319, 0.0
    %v388 = vadd.f32 %v386, %v387
    %v389 = vsel %vm371, %v321, 0.0
    %v390 = vadd.f32 %v388, %v389
    %v391 = vsel %vm371, %v324, 0.0
    %v392 = vadd.f32 %v390, %v391
    %v393 = vsel %vm371, %v326, 0.0
    %v394 = vadd.f32 %v392, %v393
    %v395 = vsel %vm371, %v329, 0.0
    %v396 = vadd.f32 %v394, %v395
    %v397 = vsel %vm371, %v331, 0.0
    %v398 = vadd.f32 %v396, %v397
    %v399 = vsel %vm371, %v334, 0.0
    %v400 = vadd.f32 %v398, %v399
    %v401 = vsel %vm371, %v336, 0.0
    %v402 = vadd.f32 %v400, %v401
    %v403 = vrot.slane %v402, 4
    %v404 = vadd.f32 %v402, %v403
    %v405 = vrot.slane %v404, 2
    %v406 = vadd.f32 %v404, %v405
    %v407 = vrot.slane %v406, 1
    %v408 = vadd.f32 %v406, %v407
    %vm409 = vcmask 516096
    %410 = vst.msk [vmem:[#allocation2] sm:$0x1] %vm409, %v408
    %v411 = vmul.f32 %v299, %v299
    %v412 = vmul.f32 %v301, %v301
    %v413 = vmul.f32 %v304, %v304
    %v414 = vmul.f32 %v306, %v306
    %v415 = vmul.f32 %v309, %v309
    %v416 = vmul.f32 %v311, %v311
    %v417 = vmul.f32 %v314, %v314
    %v418 = vmul.f32 %v316, %v316
    %v419 = vmul.f32 %v319, %v319
    %v420 = vmul.f32 %v321, %v321
    %v421 = vmul.f32 %v324, %v324
    %v422 = vmul.f32 %v326, %v326
    %v423 = vmul.f32 %v329, %v329
    %v424 = vmul.f32 %v331, %v331
    %v425 = vmul.f32 %v334, %v334
    %v426 = vmul.f32 %v336, %v336
    %v427 = vsel %vm371, %v411, 0.0
    %v428 = vsel %vm371, %v412, 0.0
    %v429 = vadd.f32 %v427, %v428
    %v430 = vsel %vm371, %v413, 0.0
    %v431 = vadd.f32 %v429, %v430
    %v432 = vsel %vm371, %v414, 0.0
    %v433 = vadd.f32 %v431, %v432
    %v434 = vsel %vm371, %v415, 0.0
    %v435 = vadd.f32 %v433, %v434
    %v436 = vsel %vm371, %v416, 0.0
    %v437 = vadd.f32 %v435, %v436
    %v438 = vsel %vm371, %v417, 0.0
    %v439 = vadd.f32 %v437, %v438
    %v440 = vsel %vm371, %v418, 0.0
    %v441 = vadd.f32 %v439, %v440
    %v442 = vsel %vm371, %v419, 0.0
    %v443 = vadd.f32 %v441, %v442
    %v444 = vsel %vm371, %v420, 0.0
    %v445 = vadd.f32 %v443, %v444
    %v446 = vsel %vm371, %v421, 0.0
    %v447 = vadd.f32 %v445, %v446
    %v448 = vsel %vm371, %v422, 0.0
    %v449 = vadd.f32 %v447, %v448
    %v450 = vsel %vm371, %v423, 0.0
    %v451 = vadd.f32 %v449, %v450
    %v452 = vsel %vm371, %v424, 0.0
    %v453 = vadd.f32 %v451, %v452
    %v454 = vsel %vm371, %v425, 0.0
    %v455 = vadd.f32 %v453, %v454
    %v456 = vsel %vm371, %v426, 0.0
    %v457 = vadd.f32 %v455, %v456
    %v458 = vrot.slane %v457, 4
    %v459 = vadd.f32 %v457, %v458
    %v460 = vrot.slane %v459, 2
    %v461 = vadd.f32 %v459, %v460
    %v462 = vrot.slane %v461, 1
    %v463 = vadd.f32 %v461, %v462
    %464 = vst.msk [vmem:[#allocation4] sm:$0x1] %vm409, %v463
    // Predicated region
    $region10: #{tpu_custom_call.1} parent=1 // pred_check
      _
    $region11: #{tpu_custom_call.1} parent=1 // pred_check_branch
      %466 = sbr.rel (0) target = $region13
    $region12: #{tpu_custom_call.1} parent=1 // pred_region
      _
    $region13: #{tpu_custom_call.1} parent=1 // pred_fallthru
      _
    // Predicated region
    $region14: #{tpu_custom_call.1} parent=1 // pred_check
      _
    $region15: #{tpu_custom_call.1} parent=1 // pred_check_branch
      %468 = sbr.rel (0) target = $region17
    $region16: #{tpu_custom_call.1} parent=1 // pred_region
      %470 = vsyncadd [#allocation3], 0
      %s472 = sshll.u32 [#allocation2], 4
      %s473 = int_to_ptr.vmem [resolvable:$true] %s472
      %s474 = sshll.u32 %s3, 4
      %s475 = int_to_ptr.hbm [resolvable:$true] %s474
      %477 = dma.vmem_to_hbm [thread:$0]  %s473, 16, %s475, [#allocation3]
    $region17: #{tpu_custom_call.1} parent=1 // pred_fallthru
      _
    // Predicated region
    $region18: #{tpu_custom_call.1} parent=1 // pred_check
      _
    $region19: #{tpu_custom_call.1} parent=1 // pred_check_branch
      %479 = sbr.rel (0) target = $region21
    $region20: #{tpu_custom_call.1} parent=1 // pred_region
      %481 = vsyncadd [#allocation5], 0
      %s483 = sshll.u32 [#allocation4], 4
      %s484 = int_to_ptr.vmem [resolvable:$true] %s483
      %s485 = sshll.u32 %s4, 4
      %s486 = int_to_ptr.hbm [resolvable:$true] %s485
      %488 = dma.vmem_to_hbm [thread:$0]  %s484, 16, %s486, [#allocation5]
    $region21: #{tpu_custom_call.1} parent=1 // pred_fallthru
      _
    // Predicated region
    $region22: #{tpu_custom_call.1} parent=1 // pred_check
      _
    $region23: #{tpu_custom_call.1} parent=1 // pred_check_branch
      %490 = sbr.rel (0) target = $region25
    $region24: #{tpu_custom_call.1} parent=1 // pred_region
      _
    $region25: #{tpu_custom_call.1} parent=1 // pred_fallthru
      _
    // Predicated region
    $region26: #{tpu_custom_call.1} parent=1 // pred_check
      _
    $region27: #{tpu_custom_call.1} parent=1 // pred_check_branch
      %492 = sbr.rel (0) target = $region29
    $region28: #{tpu_custom_call.1} parent=1 // pred_region
      %494 = dma.done [#allocation3], 16
    $region29: #{tpu_custom_call.1} parent=1 // pred_fallthru
      _
    // Predicated region
    $region30: #{tpu_custom_call.1} parent=1 // pred_check
      _
    $region31: #{tpu_custom_call.1} parent=1 // pred_check_branch
      %496 = sbr.rel (0) target = $region33
    $region32: #{tpu_custom_call.1} parent=1 // pred_region
      %498 = dma.done [#allocation5], 16
    $region33: #{tpu_custom_call.1} parent=1 // pred_fallthru
      _
    %499 = vsyncpa [#allocation3], 1
    %500 = vsyncpa [#allocation5], 1

</llo_original>
